<compile_context>
chip_gen: v7x
topology: tpu7x:2x2x1
jax: 0.10.0
libtpu: 0.0.40
codegen_flags: <defaults>
</compile_context>

<pallas_src>
import functools

import jax
import jax.numpy as jnp
from jax.experimental import pallas as pl
from jax.experimental.pallas import tpu as pltpu


# ---------------------------------------------------------------------------
# Helpers
# ---------------------------------------------------------------------------
def _round_up(x, m):
    return ((x + m - 1) // m) * m


def _pick_divisor_tile(dim, max_tile, unit):
    """Largest multiple of `unit` that divides `dim` and is <= max_tile."""
    best = unit
    t = unit
    cap = min(dim, max_tile)
    while t <= cap:
        if dim % t == 0:
            best = t
        t += unit
    return best


def _vmem_budget():
    """Generation-aware usable VMEM budget (bytes)."""
    try:
        cap = pltpu.get_tpu_info().vmem_capacity_bytes
    except Exception:
        cap = 64 << 20  # conservative: v7x per-TC VMEM
    return int(min(cap * 0.7, 100 << 20))


def _footprint_resident_w(tb, in_pad, tn):
    # double-buffered: x (bf16), W (bf16), bias (f32, sublane-padded), out (f32)
    return 2 * (tb * in_pad * 2 + in_pad * tn * 2 + 8 * tn * 4 + tb * tn * 4)


def _footprint_tiled_k(tb, tk, tn):
    return 2 * (tb * tk * 2 + tk * tn * 2 + 8 * tn * 4 + tb * tn * 4)


def _pick_tk(in_pad, tb, tn, budget):
    """Largest 128-multiple TK that divides in_pad, <= 2048 (bf16) and fits."""
    best = 128
    tk = 128
    while tk <= min(in_pad, 2048):
        if in_pad % tk == 0 and _footprint_tiled_k(tb, tk, tn) <= budget:
            best = tk
        tk += 128
    return best


# ---------------------------------------------------------------------------
# Kernels
# ---------------------------------------------------------------------------
def _head_kernel_resident_w(x_ref, w_ref, b_ref, o_ref):
    """Whole K in one block: o = x @ W + b. Grid = (N tiles, batch tiles)."""
    o_ref[...] = (
        jnp.dot(x_ref[...], w_ref[...], preferred_element_type=jnp.float32)
        + b_ref[...]
    ).astype(o_ref.dtype)


def _head_kernel_tiled_k(x_ref, w_ref, b_ref, o_ref):
    """K-tiled: accumulate into the resident f32 output block; bias at k==0."""
    k = pl.program_id(2)

    @pl.when(k == 0)
    def _():
        o_ref[...] = jnp.broadcast_to(b_ref[...], o_ref.shape)

    o_ref[...] += jnp.dot(
        x_ref[...], w_ref[...], preferred_element_type=jnp.float32
    )


# ---------------------------------------------------------------------------
# Wrappers
# ---------------------------------------------------------------------------
@functools.partial(jax.jit, static_argnames=("forecast_steps", "output_dim"))
def _xla_forward(x, w, b, forecast_steps, output_dim):
    """Small-shape fast path: plain XLA dot (exact f32)."""
    B = x.shape[0]
    out = x.reshape(B, -1) @ w + b
    return out.reshape(B, forecast_steps, output_dim)


@functools.partial(jax.jit, static_argnames=("forecast_steps", "output_dim"))
def pallas_forecast_head(x, w_p, b_p, forecast_steps, output_dim):
    """x: (B, T, F) f32; w_p: (in_pad, out_pad) bf16; b_p: (1, out_pad) f32."""
    B, T, F = x.shape
    in_dim = T * F
    out_dim = forecast_steps * output_dim
    in_pad, out_pad = w_p.shape

    # Only x is padded per call (weights are padded/cast once in __init__).
    B_pad = _round_up(B, 8)
    x_flat = x.reshape(B, in_dim).astype(jnp.bfloat16)
    if B_pad != B or in_pad != in_dim:
        x_flat = jnp.pad(x_flat, ((0, B_pad - B), (0, in_pad - in_dim)))

    budget = _vmem_budget()

    # Tiles that exactly divide the 8/128-rounded dims (no padding inflation).
    TB = _pick_divisor_tile(B_pad, 256, 8)
    TN = _pick_divisor_tile(out_pad, 512, 128)

    # v7x megacore: expose >= 2 parallel grid points when the problem allows.
    if B_pad // TB == 1 and out_pad // TN == 1:
        if out_pad >= 256:
            TN = _pick_divisor_tile(out_pad, out_pad // 2, 128)
        elif B_pad >= 16:
            TB = _pick_divisor_tile(B_pad, B_pad // 2, 8)

    fp_resident = _footprint_resident_w(TB, in_pad, TN)

    if in_pad <= 4096 and fp_resident <= budget:
        # ---- Resident-W path: no K axis, no scratch, no init/finalize. ----
        n_b, n_n = B_pad // TB, out_pad // TN
        vmem_limit = int(min(max(2 * fp_resident, 16 << 20), budget))
        cost = pl.CostEstimate(
            flops=2 * B_pad * in_pad * out_pad,
            transcendentals=0,
            bytes_accessed=(B_pad * in_pad * 2 + in_pad * out_pad * 2
                            + out_pad * 4 + B_pad * out_pad * 4),
        )
        out_p = pl.pallas_call(
            _head_kernel_resident_w,
            out_shape=jax.ShapeDtypeStruct((B_pad, out_pad), jnp.float32),
            grid_spec=pltpu.PrefetchScalarGridSpec(
                num_scalar_prefetch=0,
                # j (N tiles) outer, i (batch tiles) inner: W/bias blocks are
                # constant across the inner axis -> DMA'd once per N tile.
                grid=(n_n, n_b),
                in_specs=[
                    pl.BlockSpec((TB, in_pad), lambda j, i: (i, 0)),
                    pl.BlockSpec((in_pad, TN), lambda j, i: (0, j)),
                    pl.BlockSpec((1, TN), lambda j, i: (0, j)),
                ],
                out_specs=pl.BlockSpec((TB, TN), lambda j, i: (i, j)),
            ),
            compiler_params=pltpu.CompilerParams(
                dimension_semantics=("parallel", "parallel"),
                vmem_limit_bytes=vmem_limit,
            ),
            cost_estimate=cost,
        )(x_flat, w_p, b_p)
    else:
        # ---- K-tiled path: accumulate into resident f32 output block. ----
        TK = _pick_tk(in_pad, TB, TN, budget)
        n_b, n_n, n_k = B_pad // TB, out_pad // TN, in_pad // TK
        fp = _footprint_tiled_k(TB, TK, TN)
        vmem_limit = int(min(max(2 * fp, 16 << 20), budget))
        cost = pl.CostEstimate(
            flops=2 * B_pad * in_pad * out_pad,
            transcendentals=0,
            bytes_accessed=(B_pad * in_pad * 2
                            + n_b * in_pad * out_pad * 2   # W re-read per batch tile
                            + n_b * out_pad * 4
                            + B_pad * out_pad * 4),
        )
        out_p = pl.pallas_call(
            _head_kernel_tiled_k,
            out_shape=jax.ShapeDtypeStruct((B_pad, out_pad), jnp.float32),
            grid_spec=pltpu.PrefetchScalarGridSpec(
                num_scalar_prefetch=0,
                grid=(n_b, n_n, n_k),  # K (reduction) last
                in_specs=[
                    pl.BlockSpec((TB, TK), lambda i, j, k: (i, k)),
                    pl.BlockSpec((TK, TN), lambda i, j, k: (k, j)),
                    pl.BlockSpec((1, TN), lambda i, j, k: (0, j)),
                ],
                out_specs=pl.BlockSpec((TB, TN), lambda i, j, k: (i, j)),
            ),
            compiler_params=pltpu.CompilerParams(
                dimension_semantics=("parallel", "parallel", "arbitrary"),
                vmem_limit_bytes=vmem_limit,
            ),
            cost_estimate=cost,
        )(x_flat, w_p, b_p)

    out = out_p[:B, :out_dim].astype(x.dtype)
    return out.reshape(B, forecast_steps, output_dim)


# ---------------------------------------------------------------------------
# Model
# ---------------------------------------------------------------------------
class BaseModelJAX:
    """Mirror of BaseModel's config handling; forward implemented via Pallas."""

    # Problems smaller than this (FLOPs) use the plain-XLA fast path.
    _PALLAS_FLOP_THRESHOLD = 1 << 22

    def __init__(self, config):
        if config is None:
            raise ValueError("Model configuration required")
        self.model_name = config.get("name")
        self.setup_config = config.get("setup", {})
        self.training_config = config.get("training", {})
        # device handling is a no-op here (JAX default backend = TPU)
        self.input_size = self.training_config.get("input_size", 16)
        self.learning_rate = self.training_config.get("learning_rate", 0.001)
        self.output_dim = self.setup_config.get("output_dim", 1)
        self.forecast_steps = self.setup_config.get("forecast_steps", 7)
        self.lookback = self.training_config.get("lookback", 8)

        self.in_dim = self.lookback * self.input_size
        self.out_dim = self.forecast_steps * self.output_dim

        k_w, k_b = jax.random.split(jax.random.PRNGKey(0))
        scale = 1.0 / jnp.sqrt(jnp.float32(self.in_dim))
        self.w = jax.random.uniform(
            k_w, (self.in_dim, self.out_dim), jnp.float32,
            minval=-scale, maxval=scale)
        self.b = jax.random.uniform(
            k_b, (self.out_dim,), jnp.float32, minval=-scale, maxval=scale)

        # Padded / bf16 parameters for the Pallas path, computed once here
        # (hoisted out of the per-call wrapper per the perf review).
        in_pad = _round_up(self.in_dim, 128)
        out_pad = _round_up(self.out_dim, 128)
        self.w_p = jnp.pad(
            self.w, ((0, in_pad - self.in_dim), (0, out_pad - self.out_dim))
        ).astype(jnp.bfloat16)
        self.b_p = jnp.pad(self.b, (0, out_pad - self.out_dim)).reshape(1, out_pad)

    def forward(self, x, force_pallas=False):
        B = x.shape[0]
        flops = 2 * B * self.in_dim * self.out_dim
        if not force_pallas and flops < self._PALLAS_FLOP_THRESHOLD:
            # Toy shapes are launch/DMA-overhead bound in Pallas; use XLA.
            return _xla_forward(x, self.w, self.b,
                                self.forecast_steps, self.output_dim)
        return pallas_forecast_head(x, self.w_p, self.b_p,
                                    self.forecast_steps, self.output_dim)

    def __call__(self, x):
        return self.forward(x)


# ---------------------------------------------------------------------------
# Smoke test
# ---------------------------------------------------------------------------
if __name__ == "__main__":
    config = {
        "name": "BaseModelPallas",
        "setup": {"device": "cpu", "output_dim": 1, "forecast_steps": 7},
        "training": {"input_size": 16, "lookback": 8, "learning_rate": 0.001},
    }
    model = BaseModelJAX(config)

    key = jax.random.PRNGKey(0)
    # x: (batch=2, lookback=8, input_size=16)
    x = jax.random.normal(key, (2, 8, 16), dtype=jnp.float32)

    ref = (x.reshape(2, -1) @ model.w + model.b).reshape(2, 7, 1)

    # 1) Pallas path (forced; the toy shape would otherwise take the XLA
    #    fast path). bf16 MXU inputs with f32 accumulation -> loose tolerance.
    preds = jax.block_until_ready(model.forward(x, force_pallas=True))
    assert preds.shape == (2, 7, 1)
    assert jnp.allclose(preds, ref, atol=2e-2, rtol=2e-2), "pallas path mismatch"

    # 2) Default small-shape fast path (exact f32).
    preds_fast = jax.block_until_ready(model.forward(x))
    assert preds_fast.shape == (2, 7, 1)
    assert jnp.allclose(preds_fast, ref, atol=1e-5, rtol=1e-5), "fast path mismatch"

    print("KERNEL_OK")
</pallas_src>

<mosaic_0001>
module attributes {stable_mosaic.version = 11 : i64} {
  func.func @_head_kernel_resident_w(%arg0: i32, %arg1: i32, %arg2: memref<8x128xbf16, #tpu.memory_space<vmem>>, %arg3: memref<128x128xbf16, #tpu.memory_space<vmem>>, %arg4: memref<1x128xf32, #tpu.memory_space<vmem>>, %arg5: memref<8x128xf32, #tpu.memory_space<vmem>>) attributes {dimension_semantics = [#tpu.dimension_semantics<parallel>, #tpu.dimension_semantics<parallel>], iteration_bounds = array<i64: 1, 1>, scalar_prefetch = 0 : i64, scratch_operands = 0 : i64, tpu.core_type = #tpu.core_type<tc>, window_params = [{transform_indices = @transform_0, window_bounds = array<i64: 8, 128>}, {transform_indices = @transform_1, window_bounds = array<i64: 128, 128>}, {transform_indices = @transform_2, window_bounds = array<i64: 1, 128>}, {transform_indices = @transform_3, window_bounds = array<i64: 8, 128>}]} {
    %c0 = arith.constant 0 : index
    %c0_0 = arith.constant 0 : index
    %0 = vector.load %arg2[%c0, %c0_0] : memref<8x128xbf16, #tpu.memory_space<vmem>>, vector<8x128xbf16>
    %c0_1 = arith.constant 0 : index
    %c0_2 = arith.constant 0 : index
    %1 = vector.load %arg3[%c0_1, %c0_2] : memref<128x128xbf16, #tpu.memory_space<vmem>>, vector<128x128xbf16>
    %cst = arith.constant dense<0.000000e+00> : vector<8x128xf32>
    %2 = tpu.matmul %0, %1, %cst {dimension_numbers = #tpu.dot_dimension_numbers<[1], [0], [0], [1], [0, 0, 1, 1], [], []>} : vector<8x128xbf16>, vector<128x128xbf16>, vector<8x128xf32> -> vector<8x128xf32>
    %c0_3 = arith.constant 0 : index
    %c0_4 = arith.constant 0 : index
    %3 = vector.load %arg4[%c0_3, %c0_4] : memref<1x128xf32, #tpu.memory_space<vmem>>, vector<1x128xf32>
    %4 = vector.broadcast %3 : vector<1x128xf32> to vector<8x128xf32>
    %5 = arith.addf %2, %4 : vector<8x128xf32>
    %c0_5 = arith.constant 0 : index
    %c0_6 = arith.constant 0 : index
    %6 = vector.load %arg5[%c0_5, %c0_6] : memref<8x128xf32, #tpu.memory_space<vmem>>, vector<8x128xf32>
    tpu.vector_store %arg5[%c0_5, %c0_6], %5 {strides = array<i32>} : memref<8x128xf32, #tpu.memory_space<vmem>>, vector<8x128xf32>,
    return
  }
  func.func @transform_0(%arg0: i32, %arg1: i32) -> (i32, i32) {
    %c0_i32 = arith.constant 0 : i32
    %c0_i32_0 = arith.constant 0 : i32
    return %arg1, %c0_i32 : i32, i32
  }
  func.func @transform_1(%arg0: i32, %arg1: i32) -> (i32, i32) {
    %c0_i32 = arith.constant 0 : i32
    %c0_i32_0 = arith.constant 0 : i32
    return %c0_i32, %arg0 : i32, i32
  }
  func.func @transform_2(%arg0: i32, %arg1: i32) -> (i32, i32) {
    %c0_i32 = arith.constant 0 : i32
    %c0_i32_0 = arith.constant 0 : i32
    return %c0_i32, %arg0 : i32, i32
  }
  func.func @transform_3(%arg0: i32, %arg1: i32) -> (i32, i32) {
    %c0_i32 = arith.constant 0 : i32
    return %arg1, %arg0 : i32, i32
  }
}

</mosaic_0001>

<llo_original>
// kernel: pallas_forecast_head.1
$region0: #{pallas_forecast_head.1}
  #allocation0 [shape = 'u32[]', space=smem, size = 0x4, offset = 0x4, fixed_abs, tag = 'smem constant byte address 0x4 - core index']
  #allocation1 [shape = 'u32[144,128]{1,0:T(1,128)}', space=vmem, size = 0x12000, scoped, tag = 'internal scratch']
  %s0 = inlined_call_operand.vmem [shape: bf16[8,128], index: 0, kind: input, shape index: {}]
  %s1 = inlined_call_operand.hbm [shape: bf16[128,128], index: 1, kind: input, shape index: {}]
  %s2 = inlined_call_operand.vmem [shape: f32[1,128], index: 2, kind: input, shape index: {}]
  %s3 = inlined_call_operand.vmem [shape: f32[8,128], index: 3, kind: output, shape index: {}]
  %s4 = sld [smem:[#allocation0]]
  $region26: #{pallas_forecast_head.1} parent=0
    _
  %s6 = ssub.s32 1, %s4
  %s7 = scalar_select 0, %s6, %s4
  $region1: #{pallas_forecast_head.1} parent=0
    #allocation2 [shape = 'u8[32768]{0}', space=vmem, size = 0x8000, scoped, tag = 'input window, operand 1, single buffered']
    #allocation3 [shape = 's32[1]{0}', space=sflag, size = 0x4, scoped, tag = 'scoped memory for pallas_forecast_head.1']
    %8 = vsyncpa [#allocation3], 0
    // Predicated region
    $region2: #{pallas_forecast_head.1} parent=1 // pred_check
      _
    $region3: #{pallas_forecast_head.1} parent=1 // pred_check_branch
      %10 = sbr.rel (0) target = $region5
    $region4: #{pallas_forecast_head.1} parent=1 // pred_region
      _
    $region5: #{pallas_forecast_head.1} parent=1 // pred_fallthru
      _
    // Predicated region
    $region6: #{pallas_forecast_head.1} parent=1 // pred_check
      _
    $region7: #{pallas_forecast_head.1} parent=1 // pred_check_branch
      %12 = sbr.rel (0) target = $region9
    $region8: #{pallas_forecast_head.1} parent=1 // pred_region
      %s14 = ssub.s32 1024, 1024
      %15 = vsyncadd [#allocation3], %s14
      %s16 = sshll.u32 [#allocation2], 4
      %s17 = int_to_ptr.vmem [resolvable:$true] %s16
      %22 = dma.hbm_to_vmem [thread:$0]  %s1, 1024, %s17, [#allocation3], 64, 64, 4
    $region9: #{pallas_forecast_head.1} parent=1 // pred_fallthru
      _
    // Predicated region
    $region10: #{pallas_forecast_head.1} parent=1 // pred_check
      _
    $region11: #{pallas_forecast_head.1} parent=1 // pred_check_branch
      %24 = sbr.rel (0) target = $region13
    $region12: #{pallas_forecast_head.1} parent=1 // pred_region
      _
    $region13: #{pallas_forecast_head.1} parent=1 // pred_fallthru
      _
    // Predicated region
    $region14: #{pallas_forecast_head.1} parent=1 // pred_check
      _
    $region15: #{pallas_forecast_head.1} parent=1 // pred_check_branch
      %26 = sbr.rel (0) target = $region17
    $region16: #{pallas_forecast_head.1} parent=1 // pred_region
      %27 = dma.done [#allocation3], 1024
    $region17: #{pallas_forecast_head.1} parent=1 // pred_fallthru
      _
    %v29 = vld [vmem:[%s0] sm:$0xf]
    %v30 = vld [vmem:[#allocation2] sm:$0xf]
    %v31 = vld [vmem:[#allocation2 + $0x4] sm:$0xf]
    %v32 = vld [vmem:[#allocation2 + $0x8] sm:$0xf]
    %v33 = vld [vmem:[#allocation2 + $0xc] sm:$0xf]
    %v34 = vld [vmem:[#allocation2 + $0x10] sm:$0xf]
    %v35 = vld [vmem:[#allocation2 + $0x14] sm:$0xf]
    %v36 = vld [vmem:[#allocation2 + $0x18] sm:$0xf]
    %v37 = vld [vmem:[#allocation2 + $0x1c] sm:$0xf]
    %v38 = vld [vmem:[#allocation2 + $0x20] sm:$0xf]
    %v39 = vld [vmem:[#allocation2 + $0x24] sm:$0xf]
    %v40 = vld [vmem:[#allocation2 + $0x28] sm:$0xf]
    %v41 = vld [vmem:[#allocation2 + $0x2c] sm:$0xf]
    %v42 = vld [vmem:[#allocation2 + $0x30] sm:$0xf]
    %v43 = vld [vmem:[#allocation2 + $0x34] sm:$0xf]
    %v44 = vld [vmem:[#allocation2 + $0x38] sm:$0xf]
    %v45 = vld [vmem:[#allocation2 + $0x3c] sm:$0xf]
    %v46 = vld [vmem:[%s2] sm:$0x1]
    %v48 = vlaneseq
    %v49 = vshrl.u32 %v48, 7
    %v50 = vsub.s32 0, %v49
    %v51 = vrot.slane %v46, %v50
    %v69 = vunpack.c.l.b16 %v30
    %v70 = vunpack.c.l.b16 %v31
    %v71 = vunpack.c.l.b16 %v32
    %v72 = vunpack.c.l.b16 %v33
    %v73 = vunpack.c.l.b16 %v34
    %v74 = vunpack.c.l.b16 %v35
    %v75 = vunpack.c.l.b16 %v36
    %v76 = vunpack.c.l.b16 %v37
    %v77 = vunpack.c.l.b16 %v38
    %v78 = vunpack.c.l.b16 %v39
    %v79 = vunpack.c.l.b16 %v40
    %v80 = vunpack.c.l.b16 %v41
    %v81 = vunpack.c.l.b16 %v42
    %v82 = vunpack.c.l.b16 %v43
    %v83 = vunpack.c.l.b16 %v44
    %v84 = vunpack.c.l.b16 %v45
    %v85 = vpack.c.b16 %v70, %v69
    %v86 = vpack.c.b16 %v72, %v71
    %v87 = vpack.c.b16 %v74, %v73
    %v88 = vpack.c.b16 %v76, %v75
    %v89 = vpack.c.b16 %v78, %v77
    %v90 = vpack.c.b16 %v80, %v79
    %v91 = vpack.c.b16 %v82, %v81
    %v92 = vpack.c.b16 %v84, %v83
    %101 = vmatprep.subr.bf16.mxu0 0
    %102 = vmatpush1.bf16.msra.mxu0 %v85
    %103 = vmatprep.subr.bf16.mxu0 0
    %104 = vmatpush1.bf16.msra.mxu0 %v86
    %105 = vmatprep.subr.bf16.mxu0 0
    %106 = vmatpush1.bf16.msra.mxu0 %v87
    %107 = vmatprep.subr.bf16.mxu0 0
    %108 = vmatpush1.bf16.msra.mxu0 %v88
    %109 = vmatprep.subr.bf16.mxu0 0
    %110 = vmatpush1.bf16.msra.mxu0 %v89
    %111 = vmatprep.subr.bf16.mxu0 0
    %112 = vmatpush1.bf16.msra.mxu0 %v90
    %113 = vmatprep.subr.bf16.mxu0 0
    %114 = vmatpush1.bf16.msra.mxu0 %v91
    %115 = vmatprep.subr.bf16.mxu0 0
    %116 = vmatpush1.bf16.msra.mxu0 %v92
    %117 = vmatprep.subr.bf16.mxu0 0
    %118 = vmatpush1.bf16.msra.mxu0 0
    %119 = vmatprep.subr.bf16.mxu0 0
    %120 = vmatpush1.bf16.msra.mxu0 0
    %121 = vmatprep.subr.bf16.mxu0 0
    %122 = vmatpush1.bf16.msra.mxu0 0
    %123 = vmatprep.subr.bf16.mxu0 0
    %124 = vmatpush1.bf16.msra.mxu0 0
    %125 = vmatprep.subr.bf16.mxu0 0
    %126 = vmatpush1.bf16.msra.mxu0 0
    %127 = vmatprep.subr.bf16.mxu0 0
    %128 = vmatpush1.bf16.msra.mxu0 0
    %129 = vmatprep.subr.bf16.mxu0 0
    %130 = vmatpush1.bf16.msra.mxu0 0
    %131 = vmatprep.subr.bf16.mxu0 0
    %132 = vmatpush1.bf16.msra.mxu0 0
    %133 = vmatprep.mubr.bf16.mxu0 0
    %134 = vmatmul.mubr.bf16.gmra.mrb[0].mxu0 %v29
    %v135 = vpop.f32.mrb[0].mxu0
    %v136 = vadd.f32 %v51, %v135
    %v137 = vpop.f32.mrb[0].mxu0
    %v138 = vpop.f32.mrb[0].mxu0
    %v139 = vpop.f32.mrb[0].mxu0
    %140 = vdwg.mxu0
    %141 = vst [vmem:[%s3] sm:$0xff] %v136
    // Predicated region
    $region18: #{pallas_forecast_head.1} parent=1 // pred_check
      _
    $region19: #{pallas_forecast_head.1} parent=1 // pred_check_branch
      %143 = sbr.rel (0) target = $region21
    $region20: #{pallas_forecast_head.1} parent=1 // pred_region
      _
    $region21: #{pallas_forecast_head.1} parent=1 // pred_fallthru
      _
    // Predicated region
    $region22: #{pallas_forecast_head.1} parent=1 // pred_check
      _
    $region23: #{pallas_forecast_head.1} parent=1 // pred_check_branch
      %145 = sbr.rel (0) target = $region25
    $region24: #{pallas_forecast_head.1} parent=1 // pred_region
      _
    $region25: #{pallas_forecast_head.1} parent=1 // pred_fallthru
      _
    %146 = vsyncpa [#allocation3], 1

</llo_original>
